<compile_context>
chip_gen: v5e
topology: v5e:2x2
jax: 0.10.0
libtpu: 0.0.40
codegen_flags: <defaults>
</compile_context>

<pallas_src>
import math

import jax
import jax.numpy as jnp
from jax.experimental import pallas as pl
from jax.experimental.pallas import tpu as pltpu

_LANE = 128   # lane width (last dim)
_SUBLANE = 8  # f32 sublane (second-to-last dim)


def _round_up(x: int, m: int) -> int:
    return (x + m - 1) // m * m


def make_actor_kernel(max_action: float):
    def actor_kernel(x_ref, w1_ref, b1_ref, w2_ref, b2_ref, w3_ref, b3_ref,
                     o_ref):
        cd = w1_ref.dtype  # compute dtype fed to the MXU (f32 or bf16)
        x = x_ref[...]
        # Layer 1: Linear + ReLU (f32 accumulation on the MXU).
        h1 = jnp.dot(x, w1_ref[...], preferred_element_type=jnp.float32)
        h1 = jnp.maximum(h1 + b1_ref[...], 0.0)
        # Layer 2: Linear + ReLU.
        h2 = jnp.dot(h1.astype(cd), w2_ref[...],
                     preferred_element_type=jnp.float32)
        h2 = jnp.maximum(h2 + b2_ref[...], 0.0)
        # Layer 3: Linear.
        y = jnp.dot(h2.astype(cd), w3_ref[...],
                    preferred_element_type=jnp.float32)
        y = y + b3_ref[...]
        # mu = max_action * tanh(y)  (tanh stays f32 -> EUP).
        o_ref[...] = (max_action * jnp.tanh(y)).astype(o_ref.dtype)

    return actor_kernel


def actor_forward(state, params, max_action, *, batch_tile=256,
                  weight_dtype=None):
    """state: [B, state_dim] f32 -> mu: [B, action_dim] f32.

    batch_tile: rows per grid step (rounded up to a multiple of 8, capped so
                a single tile covers small batches).
    weight_dtype: optional (e.g. jnp.bfloat16) MXU input dtype for v6e/v7x;
                  accumulation and activations stay f32.
    """
    w1, b1, w2, b2, w3, b3 = params
    B, state_dim = state.shape
    net_width = w1.shape[1]
    action_dim = w3.shape[1]

    compute_dtype = jnp.float32 if weight_dtype is None else weight_dtype

    # --- padded (lane/sublane aligned) problem sizes ------------------------
    Sp = _round_up(state_dim, _LANE)
    Hp = _round_up(net_width, _LANE)
    Ap = _round_up(action_dim, _LANE)

    bt = _round_up(min(int(batch_tile), _round_up(B, _SUBLANE)), _SUBLANE)
    Bp = _round_up(B, bt)
    grid = (Bp // bt,)

    # --- zero-pad inputs (exact for Linear/ReLU/tanh; sliced off at the end)
    xp = jnp.pad(state, ((0, Bp - B), (0, Sp - state_dim)))
    w1p = jnp.pad(w1, ((0, Sp - state_dim), (0, Hp - net_width)))
    w2p = jnp.pad(w2, ((0, Hp - net_width), (0, Hp - net_width)))
    w3p = jnp.pad(w3, ((0, Hp - net_width), (0, Ap - action_dim)))
    b1p = jnp.pad(b1, ((0, 0), (0, Hp - net_width)))
    b2p = jnp.pad(b2, ((0, 0), (0, Hp - net_width)))
    b3p = jnp.pad(b3, ((0, 0), (0, Ap - action_dim)))

    if weight_dtype is not None:
        xp = xp.astype(compute_dtype)
        w1p = w1p.astype(compute_dtype)
        w2p = w2p.astype(compute_dtype)
        w3p = w3p.astype(compute_dtype)
    # Biases stay f32 (added after the f32 accumulation).

    in_isz = jnp.dtype(compute_dtype).itemsize
    f32_isz = 4

    # --- VMEM budget: double-buffered x/out tiles + resident weights +
    #     h1/h2 intermediates; clamp well under v7x's 64 MiB physical VMEM.
    weight_bytes = (Sp * Hp + Hp * Hp + Hp * Ap) * in_isz \
        + (Hp + Hp + Ap) * f32_isz
    tile_bytes = bt * Sp * in_isz + bt * Ap * f32_isz
    interm_bytes = 2 * bt * Hp * f32_isz
    vmem_need = 2 * (tile_bytes + weight_bytes) + interm_bytes
    vmem_limit = int(min(max(2 * vmem_need, 16 * 2 ** 20), 48 * 2 ** 20))

    # --- scheduler cost hint -------------------------------------------------
    flops = 2 * Bp * (Sp * Hp + Hp * Hp + Hp * Ap)
    bytes_accessed = Bp * Sp * in_isz + weight_bytes + Bp * Ap * f32_isz
    cost = pl.CostEstimate(flops=flops,
                           transcendentals=Bp * Ap,
                           bytes_accessed=bytes_accessed)

    kernel = make_actor_kernel(float(max_action))

    out_p = pl.pallas_call(
        kernel,
        out_shape=jax.ShapeDtypeStruct((Bp, Ap), jnp.float32),
        grid_spec=pltpu.PrefetchScalarGridSpec(
            num_scalar_prefetch=0,
            grid=grid,
            in_specs=[
                # state tiled over the batch axis; weights/biases replicated
                # (constant index_map -> fetched once, VMEM-resident).
                pl.BlockSpec((bt, Sp), lambda i: (i, 0)),
                pl.BlockSpec((Sp, Hp), lambda i: (0, 0)),
                pl.BlockSpec((1, Hp), lambda i: (0, 0)),
                pl.BlockSpec((Hp, Hp), lambda i: (0, 0)),
                pl.BlockSpec((1, Hp), lambda i: (0, 0)),
                pl.BlockSpec((Hp, Ap), lambda i: (0, 0)),
                pl.BlockSpec((1, Ap), lambda i: (0, 0)),
            ],
            out_specs=pl.BlockSpec((bt, Ap), lambda i: (i, 0)),
        ),
        compiler_params=pltpu.CompilerParams(
            dimension_semantics=("parallel",),
            vmem_limit_bytes=vmem_limit,
        ),
        cost_estimate=cost,
    )(xp, w1p, b1p, w2p, b2p, w3p, b3p)

    return out_p[:B, :action_dim]


def init_actor_params(key, state_dim, net_width, action_dim):
    """Deterministic init mimicking PyTorch nn.Linear default
    (uniform in [-1/sqrt(fan_in), 1/sqrt(fan_in)]). Weights stored [in, out]."""
    keys = jax.random.split(key, 6)

    def linear(kw, kb, fan_in, fan_out):
        bound = 1.0 / math.sqrt(fan_in)
        w = jax.random.uniform(kw, (fan_in, fan_out), jnp.float32,
                               -bound, bound)
        b = jax.random.uniform(kb, (1, fan_out), jnp.float32, -bound, bound)
        return w, b

    w1, b1 = linear(keys[0], keys[1], state_dim, net_width)
    w2, b2 = linear(keys[2], keys[3], net_width, net_width)
    w3, b3 = linear(keys[4], keys[5], net_width, action_dim)
    return (w1, b1, w2, b2, w3, b3)


def actor_forward_ref(state, params, max_action):
    """Pure-JAX reference for correctness checking."""
    w1, b1, w2, b2, w3, b3 = params
    h1 = jnp.maximum(state @ w1 + b1, 0.0)
    h2 = jnp.maximum(h1 @ w2 + b2, 0.0)
    y = h2 @ w3 + b3
    return max_action * jnp.tanh(y)


if __name__ == "__main__":
    # Shapes consistent with the module: small states, hidden width 32,
    # 4 actions, max_action = 2.0.
    batch = 8
    state_dim = 16
    net_width = 32
    action_dim = 4
    max_action = 2.0

    key = jax.random.PRNGKey(0)
    k_params, k_state, k_big = jax.random.split(key, 3)

    params = init_actor_params(k_params, state_dim, net_width, action_dim)

    # --- small batch (single-tile grid) -------------------------------------
    state = jax.random.normal(k_state, (batch, state_dim), jnp.float32)
    mu = jax.block_until_ready(actor_forward(state, params, max_action))
    mu_ref = actor_forward_ref(state, params, max_action)
    assert mu.shape == (batch, action_dim)
    assert jnp.allclose(mu, mu_ref, atol=1e-5, rtol=1e-5), \
        "mismatch vs reference (small batch)"

    # --- larger batch: multi-tile grid (pipelining + v7x megacore sharding) --
    big_state = jax.random.normal(k_big, (512, state_dim), jnp.float32)
    mu_big = jax.block_until_ready(
        actor_forward(big_state, params, max_action, batch_tile=128))
    mu_big_ref = actor_forward_ref(big_state, params, max_action)
    assert mu_big.shape == (512, action_dim)
    assert jnp.allclose(mu_big, mu_big_ref, atol=1e-5, rtol=1e-5), \
        "mismatch vs reference (large batch)"

    # --- bf16 weight path (v6e/v7x MXU throughput option), looser tolerance --
    mu_bf16 = jax.block_until_ready(
        actor_forward(big_state, params, max_action, batch_tile=128,
                      weight_dtype=jnp.bfloat16))
    assert jnp.allclose(mu_bf16, mu_big_ref, atol=1e-1, rtol=1e-1), \
        "mismatch vs reference (bf16 path)"

    print("KERNEL_OK")
</pallas_src>

<mosaic_0001>
module attributes {stable_mosaic.version = 11 : i64} {
  func.func @actor_kernel(%arg0: i32, %arg1: memref<8x128xf32, #tpu.memory_space<vmem>>, %arg2: memref<128x128xf32, #tpu.memory_space<vmem>>, %arg3: memref<1x128xf32, #tpu.memory_space<vmem>>, %arg4: memref<128x128xf32, #tpu.memory_space<vmem>>, %arg5: memref<1x128xf32, #tpu.memory_space<vmem>>, %arg6: memref<128x128xf32, #tpu.memory_space<vmem>>, %arg7: memref<1x128xf32, #tpu.memory_space<vmem>>, %arg8: memref<8x128xf32, #tpu.memory_space<vmem>>) attributes {dimension_semantics = [#tpu.dimension_semantics<parallel>], iteration_bounds = array<i64: 1>, scalar_prefetch = 0 : i64, scratch_operands = 0 : i64, tpu.core_type = #tpu.core_type<tc>, window_params = [{transform_indices = @transform_0, window_bounds = array<i64: 8, 128>}, {pipeline_mode = #tpu.pipeline_mode<synchronous>, transform_indices = @transform_1, window_bounds = array<i64: 128, 128>}, {pipeline_mode = #tpu.pipeline_mode<synchronous>, transform_indices = @transform_2, window_bounds = array<i64: 1, 128>}, {pipeline_mode = #tpu.pipeline_mode<synchronous>, transform_indices = @transform_3, window_bounds = array<i64: 128, 128>}, {pipeline_mode = #tpu.pipeline_mode<synchronous>, transform_indices = @transform_4, window_bounds = array<i64: 1, 128>}, {pipeline_mode = #tpu.pipeline_mode<synchronous>, transform_indices = @transform_5, window_bounds = array<i64: 128, 128>}, {pipeline_mode = #tpu.pipeline_mode<synchronous>, transform_indices = @transform_6, window_bounds = array<i64: 1, 128>}, {transform_indices = @transform_7, window_bounds = array<i64: 8, 128>}]} {
    %c0 = arith.constant 0 : index
    %c0_0 = arith.constant 0 : index
    %0 = vector.load %arg1[%c0, %c0_0] : memref<8x128xf32, #tpu.memory_space<vmem>>, vector<8x128xf32>
    %c0_1 = arith.constant 0 : index
    %c0_2 = arith.constant 0 : index
    %1 = vector.load %arg2[%c0_1, %c0_2] : memref<128x128xf32, #tpu.memory_space<vmem>>, vector<128x128xf32>
    %cst = arith.constant dense<0.000000e+00> : vector<8x128xf32>
    %2 = tpu.matmul %0, %1, %cst {dimension_numbers = #tpu.dot_dimension_numbers<[1], [0], [0], [1], [0, 0, 1, 1], [], []>} : vector<8x128xf32>, vector<128x128xf32>, vector<8x128xf32> -> vector<8x128xf32>
    %c0_3 = arith.constant 0 : index
    %c0_4 = arith.constant 0 : index
    %3 = vector.load %arg3[%c0_3, %c0_4] : memref<1x128xf32, #tpu.memory_space<vmem>>, vector<1x128xf32>
    %4 = vector.broadcast %3 : vector<1x128xf32> to vector<8x128xf32>
    %5 = arith.addf %2, %4 : vector<8x128xf32>
    %cst_5 = arith.constant 0.000000e+00 : f32
    %6 = vector.broadcast %cst_5 : f32 to vector<8x128xf32>
    %7 = arith.maximumf %5, %6 : vector<8x128xf32>
    %c0_6 = arith.constant 0 : index
    %c0_7 = arith.constant 0 : index
    %8 = vector.load %arg4[%c0_6, %c0_7] : memref<128x128xf32, #tpu.memory_space<vmem>>, vector<128x128xf32>
    %cst_8 = arith.constant dense<0.000000e+00> : vector<8x128xf32>
    %9 = tpu.matmul %7, %8, %cst_8 {dimension_numbers = #tpu.dot_dimension_numbers<[1], [0], [0], [1], [0, 0, 1, 1], [], []>} : vector<8x128xf32>, vector<128x128xf32>, vector<8x128xf32> -> vector<8x128xf32>
    %c0_9 = arith.constant 0 : index
    %c0_10 = arith.constant 0 : index
    %10 = vector.load %arg5[%c0_9, %c0_10] : memref<1x128xf32, #tpu.memory_space<vmem>>, vector<1x128xf32>
    %11 = vector.broadcast %10 : vector<1x128xf32> to vector<8x128xf32>
    %12 = arith.addf %9, %11 : vector<8x128xf32>
    %cst_11 = arith.constant 0.000000e+00 : f32
    %13 = vector.broadcast %cst_11 : f32 to vector<8x128xf32>
    %14 = arith.maximumf %12, %13 : vector<8x128xf32>
    %c0_12 = arith.constant 0 : index
    %c0_13 = arith.constant 0 : index
    %15 = vector.load %arg6[%c0_12, %c0_13] : memref<128x128xf32, #tpu.memory_space<vmem>>, vector<128x128xf32>
    %cst_14 = arith.constant dense<0.000000e+00> : vector<8x128xf32>
    %16 = tpu.matmul %14, %15, %cst_14 {dimension_numbers = #tpu.dot_dimension_numbers<[1], [0], [0], [1], [0, 0, 1, 1], [], []>} : vector<8x128xf32>, vector<128x128xf32>, vector<8x128xf32> -> vector<8x128xf32>
    %c0_15 = arith.constant 0 : index
    %c0_16 = arith.constant 0 : index
    %17 = vector.load %arg7[%c0_15, %c0_16] : memref<1x128xf32, #tpu.memory_space<vmem>>, vector<1x128xf32>
    %18 = vector.broadcast %17 : vector<1x128xf32> to vector<8x128xf32>
    %19 = arith.addf %16, %18 : vector<8x128xf32>
    %20 = math.tanh %19 : vector<8x128xf32>
    %cst_17 = arith.constant 2.000000e+00 : f32
    %21 = vector.broadcast %cst_17 : f32 to vector<8x128xf32>
    %22 = arith.mulf %21, %20 : vector<8x128xf32>
    %c0_18 = arith.constant 0 : index
    %c0_19 = arith.constant 0 : index
    %23 = vector.load %arg8[%c0_18, %c0_19] : memref<8x128xf32, #tpu.memory_space<vmem>>, vector<8x128xf32>
    tpu.vector_store %arg8[%c0_18, %c0_19], %22 {strides = array<i32>} : memref<8x128xf32, #tpu.memory_space<vmem>>, vector<8x128xf32>,
    return
  }
  func.func @transform_0(%arg0: i32) -> (i32, i32) {
    %c0_i32 = arith.constant 0 : i32
    %c0_i32_0 = arith.constant 0 : i32
    return %arg0, %c0_i32 : i32, i32
  }
  func.func @transform_1(%arg0: i32) -> (i32, i32) {
    %c0_i32 = arith.constant 0 : i32
    %c0_i32_0 = arith.constant 0 : i32
    %c0_i32_1 = arith.constant 0 : i32
    return %c0_i32, %c0_i32_0 : i32, i32
  }
  func.func @transform_2(%arg0: i32) -> (i32, i32) {
    %c0_i32 = arith.constant 0 : i32
    %c0_i32_0 = arith.constant 0 : i32
    %c0_i32_1 = arith.constant 0 : i32
    return %c0_i32, %c0_i32_0 : i32, i32
  }
  func.func @transform_3(%arg0: i32) -> (i32, i32) {
    %c0_i32 = arith.constant 0 : i32
    %c0_i32_0 = arith.constant 0 : i32
    %c0_i32_1 = arith.constant 0 : i32
    return %c0_i32, %c0_i32_0 : i32, i32
  }
  func.func @transform_4(%arg0: i32) -> (i32, i32) {
    %c0_i32 = arith.constant 0 : i32
    %c0_i32_0 = arith.constant 0 : i32
    %c0_i32_1 = arith.constant 0 : i32
    return %c0_i32, %c0_i32_0 : i32, i32
  }
  func.func @transform_5(%arg0: i32) -> (i32, i32) {
    %c0_i32 = arith.constant 0 : i32
    %c0_i32_0 = arith.constant 0 : i32
    %c0_i32_1 = arith.constant 0 : i32
    return %c0_i32, %c0_i32_0 : i32, i32
  }
  func.func @transform_6(%arg0: i32) -> (i32, i32) {
    %c0_i32 = arith.constant 0 : i32
    %c0_i32_0 = arith.constant 0 : i32
    %c0_i32_1 = arith.constant 0 : i32
    return %c0_i32, %c0_i32_0 : i32, i32
  }
  func.func @transform_7(%arg0: i32) -> (i32, i32) {
    %c0_i32 = arith.constant 0 : i32
    %c0_i32_0 = arith.constant 0 : i32
    return %arg0, %c0_i32 : i32, i32
  }
}

</mosaic_0001>

<llo_original>
// kernel: tpu_custom_call.1
$region0: #{tpu_custom_call.1}
  #allocation0 [shape = 'u32[]', space=smem, size = 0x4, offset = 0x4, fixed_abs, tag = 'smem constant byte address 0x4 - core index']
  #allocation1 [shape = 'u32[72,128]{1,0:T(1,128)}', space=vmem, size = 0x9000, scoped, tag = 'internal scratch']
  %s0 = inlined_call_operand.hbm [shape: f32[8,128], index: 0, kind: input, shape index: {}]
  %s1 = inlined_call_operand.hbm [shape: f32[128,128], index: 1, kind: input, shape index: {}]
  %s2 = inlined_call_operand.vmem [shape: f32[1,128], index: 2, kind: input, shape index: {}]
  %s3 = inlined_call_operand.hbm [shape: f32[128,128], index: 3, kind: input, shape index: {}]
  %s4 = inlined_call_operand.vmem [shape: f32[1,128], index: 4, kind: input, shape index: {}]
  %s5 = inlined_call_operand.hbm [shape: f32[128,128], index: 5, kind: input, shape index: {}]
  %s6 = inlined_call_operand.vmem [shape: f32[1,128], index: 6, kind: input, shape index: {}]
  %s7 = inlined_call_operand.hbm [shape: f32[8,128], index: 7, kind: output, shape index: {}]
  %s8 = sld [smem:[#allocation0]]
  $region54: #{tpu_custom_call.1} parent=0
    _
  %s10 = ssub.s32 1, %s8
  %s11 = scalar_select 0, %s10, %s8
  $region1: #{tpu_custom_call.1} parent=0
    #allocation2 [shape = 'u8[4096]{0}', space=vmem, size = 0x1000, scoped, tag = 'input window, operand 0, single buffered']
    #allocation3 [shape = 's32[1]{0}', space=sflag, size = 0x4, scoped, tag = 'scoped memory for tpu_custom_call.1']
    #allocation4 [shape = 's32[1]{0}', space=sflag, size = 0x4, scoped, tag = 'scoped memory for tpu_custom_call.1']
    #allocation5 [shape = 'u8[65536]{0}', space=vmem, size = 0x10000, scoped, tag = 'input window, operand 1, single buffered']
    #allocation6 [shape = 's32[1]{0}', space=sflag, size = 0x4, scoped, tag = 'scoped memory for tpu_custom_call.1']
    #allocation7 [shape = 'u8[65536]{0}', space=vmem, size = 0x10000, scoped, tag = 'input window, operand 3, single buffered']
    #allocation8 [shape = 'u8[65536]{0}', space=vmem, size = 0x10000, scoped, tag = 'input window, operand 5, single buffered']
    #allocation9 [shape = 's32[1]{0}', space=sflag, size = 0x4, scoped, tag = 'scoped memory for tpu_custom_call.1']
    #allocation10 [shape = 'u8[4096]{0}', space=vmem, size = 0x1000, scoped, tag = 'output window, operand 0, single buffered']
    %12 = vsyncpa [#allocation3], 0
    %13 = vsyncpa [#allocation6], 0
    %14 = vsyncpa [#allocation9], 0
    %15 = vsyncpa [#allocation4], 0
    // Predicated region
    $region2: #{tpu_custom_call.1} parent=1 // pred_check
      _
    $region3: #{tpu_custom_call.1} parent=1 // pred_check_branch
      %17 = sbr.rel (0) target = $region5
    $region4: #{tpu_custom_call.1} parent=1 // pred_region
      %19 = vsyncadd [#allocation3], 0
      %s21 = sshll.u32 %s0, 4
      %s22 = int_to_ptr.hbm [resolvable:$true] %s21
      %s23 = sshll.u32 [#allocation2], 4
      %s24 = int_to_ptr.vmem [resolvable:$true] %s23
      %26 = dma.hbm_to_vmem [thread:$0]  %s22, 128, %s24, [#allocation3]
    $region5: #{tpu_custom_call.1} parent=1 // pred_fallthru
      _
    // Predicated region
    $region6: #{tpu_custom_call.1} parent=1 // pred_check
      _
    $region7: #{tpu_custom_call.1} parent=1 // pred_check_branch
      %28 = sbr.rel (0) target = $region9
    $region8: #{tpu_custom_call.1} parent=1 // pred_region
      %30 = vsyncadd [#allocation6], 0
      %s31 = sshll.u32 %s1, 4
      %s32 = int_to_ptr.hbm [resolvable:$true] %s31
      %s33 = sshll.u32 [#allocation5], 4
      %s34 = int_to_ptr.vmem [resolvable:$true] %s33
      %39 = dma.hbm_to_vmem [thread:$0]  %s32, 2048, %s34, [#allocation6], 128, 128, 8
    $region9: #{tpu_custom_call.1} parent=1 // pred_fallthru
      _
    // Predicated region
    $region10: #{tpu_custom_call.1} parent=1 // pred_check
      _
    $region11: #{tpu_custom_call.1} parent=1 // pred_check_branch
      %41 = sbr.rel (0) target = $region13
    $region12: #{tpu_custom_call.1} parent=1 // pred_region
      _
    $region13: #{tpu_custom_call.1} parent=1 // pred_fallthru
      _
    // Predicated region
    $region14: #{tpu_custom_call.1} parent=1 // pred_check
      _
    $region15: #{tpu_custom_call.1} parent=1 // pred_check_branch
      %43 = sbr.rel (0) target = $region17
    $region16: #{tpu_custom_call.1} parent=1 // pred_region
      %45 = vsyncadd [#allocation6], 0
      %s46 = sshll.u32 %s3, 4
      %s47 = int_to_ptr.hbm [resolvable:$true] %s46
      %s48 = sshll.u32 [#allocation7], 4
      %s49 = int_to_ptr.vmem [resolvable:$true] %s48
      %54 = dma.hbm_to_vmem [thread:$0]  %s47, 2048, %s49, [#allocation6], 128, 128, 8
    $region17: #{tpu_custom_call.1} parent=1 // pred_fallthru
      _
    // Predicated region
    $region18: #{tpu_custom_call.1} parent=1 // pred_check
      _
    $region19: #{tpu_custom_call.1} parent=1 // pred_check_branch
      %56 = sbr.rel (0) target = $region21
    $region20: #{tpu_custom_call.1} parent=1 // pred_region
      _
    $region21: #{tpu_custom_call.1} parent=1 // pred_fallthru
      _
    // Predicated region
    $region22: #{tpu_custom_call.1} parent=1 // pred_check
      _
    $region23: #{tpu_custom_call.1} parent=1 // pred_check_branch
      %58 = sbr.rel (0) target = $region25
    $region24: #{tpu_custom_call.1} parent=1 // pred_region
      %60 = vsyncadd [#allocation9], 0
      %s61 = sshll.u32 %s5, 4
      %s62 = int_to_ptr.hbm [resolvable:$true] %s61
      %s63 = sshll.u32 [#allocation8], 4
      %s64 = int_to_ptr.vmem [resolvable:$true] %s63
      %69 = dma.hbm_to_vmem [thread:$0]  %s62, 2048, %s64, [#allocation9], 128, 128, 8
    $region25: #{tpu_custom_call.1} parent=1 // pred_fallthru
      _
    // Predicated region
    $region26: #{tpu_custom_call.1} parent=1 // pred_check
      _
    $region27: #{tpu_custom_call.1} parent=1 // pred_check_branch
      %71 = sbr.rel (0) target = $region29
    $region28: #{tpu_custom_call.1} parent=1 // pred_region
      _
    $region29: #{tpu_custom_call.1} parent=1 // pred_fallthru
      _
    // Predicated region
    $region30: #{tpu_custom_call.1} parent=1 // pred_check
      _
    $region31: #{tpu_custom_call.1} parent=1 // pred_check_branch
      %73 = sbr.rel (0) target = $region33
    $region32: #{tpu_custom_call.1} parent=1 // pred_region
      %75 = dma.done [#allocation3], 128
    $region33: #{tpu_custom_call.1} parent=1 // pred_fallthru
      _
    // Predicated region
    $region34: #{tpu_custom_call.1} parent=1 // pred_check
      _
    $region35: #{tpu_custom_call.1} parent=1 // pred_check_branch
      %77 = sbr.rel (0) target = $region37
    $region36: #{tpu_custom_call.1} parent=1 // pred_region
      %79 = dma.done [#allocation6], 2048
    $region37: #{tpu_custom_call.1} parent=1 // pred_fallthru
      _
    // Predicated region
    $region38: #{tpu_custom_call.1} parent=1 // pred_check
      _
    $region39: #{tpu_custom_call.1} parent=1 // pred_check_branch
      %81 = sbr.rel (0) target = $region41
    $region40: #{tpu_custom_call.1} parent=1 // pred_region
      %83 = dma.done [#allocation6], 2048
    $region41: #{tpu_custom_call.1} parent=1 // pred_fallthru
      _
    // Predicated region
    $region42: #{tpu_custom_call.1} parent=1 // pred_check
      _
    $region43: #{tpu_custom_call.1} parent=1 // pred_check_branch
      %85 = sbr.rel (0) target = $region45
    $region44: #{tpu_custom_call.1} parent=1 // pred_region
      %87 = dma.done [#allocation9], 2048
    $region45: #{tpu_custom_call.1} parent=1 // pred_fallthru
      _
    %v88 = vld [vmem:[#allocation2] sm:$0xff]
    %v89 = vld [vmem:[#allocation5] sm:$0xff]
    %v90 = vld [vmem:[#allocation5 + $0x8] sm:$0xff]
    %v91 = vld [vmem:[#allocation5 + $0x10] sm:$0xff]
    %v92 = vld [vmem:[#allocation5 + $0x18] sm:$0xff]
    %v93 = vld [vmem:[#allocation5 + $0x20] sm:$0xff]
    %v94 = vld [vmem:[#allocation5 + $0x28] sm:$0xff]
    %v95 = vld [vmem:[#allocation5 + $0x30] sm:$0xff]
    %v96 = vld [vmem:[#allocation5 + $0x38] sm:$0xff]
    %v97 = vld [vmem:[#allocation5 + $0x40] sm:$0xff]
    %v98 = vld [vmem:[#allocation5 + $0x48] sm:$0xff]
    %v99 = vld [vmem:[#allocation5 + $0x50] sm:$0xff]
    %v100 = vld [vmem:[#allocation5 + $0x58] sm:$0xff]
    %v101 = vld [vmem:[#allocation5 + $0x60] sm:$0xff]
    %v102 = vld [vmem:[#allocation5 + $0x68] sm:$0xff]
    %v103 = vld [vmem:[#allocation5 + $0x70] sm:$0xff]
    %v104 = vld [vmem:[#allocation5 + $0x78] sm:$0xff]
    %v105 = vld [vmem:[%s2] sm:$0x1]
    %v107 = vperm.slane %v105, 0
    %109 = vmatpush.msra.mxu0 %v104
    %110 = vmatpush.msra.mxu0 %v103
    %111 = vmatpush.msra.mxu0 %v102
    %112 = vmatpush.msra.mxu0 %v101
    %113 = vmatpush.msra.mxu0 %v100
    %114 = vmatpush.msra.mxu0 %v99
    %115 = vmatpush.msra.mxu0 %v98
    %116 = vmatpush.msra.mxu0 %v97
    %117 = vmatpush.msra.mxu0 %v96
    %118 = vmatpush.msra.mxu0 %v95
    %119 = vmatpush.msra.mxu0 %v94
    %120 = vmatpush.msra.mxu0 %v93
    %121 = vmatpush.msra.mxu0 %v92
    %122 = vmatpush.msra.mxu0 %v91
    %123 = vmatpush.msra.mxu0 %v90
    %124 = vmatpush.msra.mxu0 %v89
    %125 = vmatmul.f32.gmra.mxu0 %v88
    %v126 = vpop.f32.mrf.mxu0
    %v127 = vadd.f32 %v107, %v126
    %128 = vdwg.mxu0
    %v129 = vmax.f32 %v127, 0.0
    %v130 = vld [vmem:[#allocation7] sm:$0xff]
    %v131 = vld [vmem:[#allocation7 + $0x8] sm:$0xff]
    %v132 = vld [vmem:[#allocation7 + $0x10] sm:$0xff]
    %v133 = vld [vmem:[#allocation7 + $0x18] sm:$0xff]
    %v134 = vld [vmem:[#allocation7 + $0x20] sm:$0xff]
    %v135 = vld [vmem:[#allocation7 + $0x28] sm:$0xff]
    %v136 = vld [vmem:[#allocation7 + $0x30] sm:$0xff]
    %v137 = vld [vmem:[#allocation7 + $0x38] sm:$0xff]
    %v138 = vld [vmem:[#allocation7 + $0x40] sm:$0xff]
    %v139 = vld [vmem:[#allocation7 + $0x48] sm:$0xff]
    %v140 = vld [vmem:[#allocation7 + $0x50] sm:$0xff]
    %v141 = vld [vmem:[#allocation7 + $0x58] sm:$0xff]
    %v142 = vld [vmem:[#allocation7 + $0x60] sm:$0xff]
    %v143 = vld [vmem:[#allocation7 + $0x68] sm:$0xff]
    %v144 = vld [vmem:[#allocation7 + $0x70] sm:$0xff]
    %v145 = vld [vmem:[#allocation7 + $0x78] sm:$0xff]
    %v146 = vld [vmem:[%s4] sm:$0x1]
    %v148 = vperm.slane %v146, 0
    %150 = vmatpush.msra.mxu0 %v145
    %151 = vmatpush.msra.mxu0 %v144
    %152 = vmatpush.msra.mxu0 %v143
    %153 = vmatpush.msra.mxu0 %v142
    %154 = vmatpush.msra.mxu0 %v141
    %155 = vmatpush.msra.mxu0 %v140
    %156 = vmatpush.msra.mxu0 %v139
    %157 = vmatpush.msra.mxu0 %v138
    %158 = vmatpush.msra.mxu0 %v137
    %159 = vmatpush.msra.mxu0 %v136
    %160 = vmatpush.msra.mxu0 %v135
    %161 = vmatpush.msra.mxu0 %v134
    %162 = vmatpush.msra.mxu0 %v133
    %163 = vmatpush.msra.mxu0 %v132
    %164 = vmatpush.msra.mxu0 %v131
    %165 = vmatpush.msra.mxu0 %v130
    %166 = vmatmul.f32.gmra.mxu0 %v129
    %v167 = vpop.f32.mrf.mxu0
    %v168 = vadd.f32 %v148, %v167
    %169 = vdwg.mxu0
    %v170 = vmax.f32 %v168, 0.0
    %v171 = vld [vmem:[#allocation8] sm:$0xff]
    %v172 = vld [vmem:[#allocation8 + $0x8] sm:$0xff]
    %v173 = vld [vmem:[#allocation8 + $0x10] sm:$0xff]
    %v174 = vld [vmem:[#allocation8 + $0x18] sm:$0xff]
    %v175 = vld [vmem:[#allocation8 + $0x20] sm:$0xff]
    %v176 = vld [vmem:[#allocation8 + $0x28] sm:$0xff]
    %v177 = vld [vmem:[#allocation8 + $0x30] sm:$0xff]
    %v178 = vld [vmem:[#allocation8 + $0x38] sm:$0xff]
    %v179 = vld [vmem:[#allocation8 + $0x40] sm:$0xff]
    %v180 = vld [vmem:[#allocation8 + $0x48] sm:$0xff]
    %v181 = vld [vmem:[#allocation8 + $0x50] sm:$0xff]
    %v182 = vld [vmem:[#allocation8 + $0x58] sm:$0xff]
    %v183 = vld [vmem:[#allocation8 + $0x60] sm:$0xff]
    %v184 = vld [vmem:[#allocation8 + $0x68] sm:$0xff]
    %v185 = vld [vmem:[#allocation8 + $0x70] sm:$0xff]
    %v186 = vld [vmem:[#allocation8 + $0x78] sm:$0xff]
    %v187 = vld [vmem:[%s6] sm:$0x1]
    %v189 = vperm.slane %v187, 0
    %191 = vmatpush.msra.mxu0 %v186
    %192 = vmatpush.msra.mxu0 %v185
    %193 = vmatpush.msra.mxu0 %v184
    %194 = vmatpush.msra.mxu0 %v183
    %195 = vmatpush.msra.mxu0 %v182
    %196 = vmatpush.msra.mxu0 %v181
    %197 = vmatpush.msra.mxu0 %v180
    %198 = vmatpush.msra.mxu0 %v179
    %199 = vmatpush.msra.mxu0 %v178
    %200 = vmatpush.msra.mxu0 %v177
    %201 = vmatpush.msra.mxu0 %v176
    %202 = vmatpush.msra.mxu0 %v175
    %203 = vmatpush.msra.mxu0 %v174
    %204 = vmatpush.msra.mxu0 %v173
    %205 = vmatpush.msra.mxu0 %v172
    %206 = vmatpush.msra.mxu0 %v171
    %207 = vmatmul.f32.gmra.mxu0 %v170
    %v208 = vpop.f32.mrf.mxu0
    %v209 = vadd.f32 %v189, %v208
    %210 = vdwg.mxu0
    %v211 = vtanh.pop %v209
    %v212 = vmul.f32 %v211, 2.0
    %213 = vst [vmem:[#allocation10] sm:$0xff] %v212
    // Predicated region
    $region46: #{tpu_custom_call.1} parent=1 // pred_check
      _
    $region47: #{tpu_custom_call.1} parent=1 // pred_check_branch
      %215 = sbr.rel (0) target = $region49
    $region48: #{tpu_custom_call.1} parent=1 // pred_region
      %217 = vsyncadd [#allocation4], 0
      %s219 = sshll.u32 [#allocation10], 4
      %s220 = int_to_ptr.vmem [resolvable:$true] %s219
      %s221 = sshll.u32 %s7, 4
      %s222 = int_to_ptr.hbm [resolvable:$true] %s221
      %224 = dma.vmem_to_hbm [thread:$0]  %s220, 128, %s222, [#allocation4]
    $region49: #{tpu_custom_call.1} parent=1 // pred_fallthru
      _
    // Predicated region
    $region50: #{tpu_custom_call.1} parent=1 // pred_check
      _
    $region51: #{tpu_custom_call.1} parent=1 // pred_check_branch
      %226 = sbr.rel (0) target = $region53
    $region52: #{tpu_custom_call.1} parent=1 // pred_region
      %228 = dma.done [#allocation4], 128
    $region53: #{tpu_custom_call.1} parent=1 // pred_fallthru
      _
    %229 = vsyncpa [#allocation3], 1
    %230 = vsyncpa [#allocation6], 1
    %231 = vsyncpa [#allocation9], 1
    %232 = vsyncpa [#allocation4], 1

</llo_original>
